<compile_context>
chip_gen: v7x
topology: tpu7x:2x2x1
jax: 0.10.0
libtpu: 0.0.40
codegen_flags: <defaults>
</compile_context>

<pallas_src>
import functools

import jax
import jax.numpy as jnp
from jax.experimental import pallas as pl
from jax.experimental.pallas import tpu as pltpu


def _round_up(n: int, m: int) -> int:
    return ((n + m - 1) // m) * m


def _cdiv(a: int, b: int) -> int:
    return (a + b - 1) // b


def _tpu_defaults():
    """Per-generation tiling defaults: row tile, lane padding, F chunk, VMEM cap."""
    try:
        kind = jax.devices()[0].device_kind.lower()
    except Exception:
        kind = ""
    if "v5" in kind:   # v5e/v5p: 128-wide MXU, small scoped-VMEM default
        return dict(row_tile=128, lane=128, f_chunk=512, vmem_cap=96 * 2**20)
    if "v6" in kind:   # v6e: 2x256x256 MXU, 128 MiB VMEM
        return dict(row_tile=256, lane=256, f_chunk=512, vmem_cap=96 * 2**20)
    # v7x (64 MiB VMEM per TC) and unknown chips: conservative cap.
    return dict(row_tile=256, lane=256, f_chunk=512, vmem_cap=48 * 2**20)


def _ffn_kernel(x_ref, w1_ref, b1_ref, w2_ref, b2_ref, o_ref, acc_ref):
    f = pl.program_id(1)

    @pl.when(f == 0)
    def _():
        acc_ref[...] = jnp.zeros_like(acc_ref)

    # hidden slice: relu(x @ W1[:, fc] + b1[fc]).  f32->bf16 cast on the VPU (hidden
    # under the MXU), f32 accumulation on the MXU.
    xb = x_ref[...].astype(w1_ref.dtype)
    h = jnp.dot(xb, w1_ref[...], preferred_element_type=jnp.float32)
    h = jnp.maximum(h + b1_ref[...], 0.0)
    # Fold this F chunk's second-matmul contribution into the f32 accumulator.
    acc_ref[...] += jnp.dot(h.astype(w2_ref.dtype), w2_ref[...],
                            preferred_element_type=jnp.float32)

    @pl.when(f == pl.num_programs(1) - 1)
    def _():
        # ReLU after the final linear mirrors the PyTorch `i < len(self.layers)` quirk.
        o_ref[...] = jnp.maximum(acc_ref[...] + b2_ref[...], 0.0).astype(o_ref.dtype)


@functools.partial(
    jax.jit,
    static_argnames=("out_features", "row_tile", "f_chunk", "vmem_cap", "out_dtype"))
def _ffn_apply(x, w1_p, b1_p, w2_p, b2_p, *, out_features, row_tile, f_chunk,
               vmem_cap, out_dtype):
    """x: [B, S, Din]; padded params come from make_positionwise_feed_forward."""
    B, S, Din = x.shape
    F_pad = w1_p.shape[1]
    Dout_p = w2_p.shape[1]
    out_dt = jnp.dtype(out_dtype)

    M = B * S
    x2d = x.reshape(M, Din)               # no wrapper pad / cast: kernel casts the tile

    # --- row tiling (all static under jit) -----------------------------------
    sub = max(8, 32 // x2d.dtype.itemsize)            # sublane multiple for x tiles
    rt = max(sub, min(int(row_tile), _round_up(M, sub)))
    # Keep >= 2 row blocks so the "parallel" M axis shards across both TensorCores
    # on v7x megacore (harmless on single-TC v5e/v6e).
    if _cdiv(M, rt) < 2 and M > sub:
        rt = max(sub, _round_up(_cdiv(M, 2), sub))
    n_m = _cdiv(M, rt)
    fb = int(f_chunk)
    n_f = F_pad // fb

    # --- explicit VMEM budget: double buffers + scratch + hidden temporaries ---
    footprint = (
        2 * rt * Din * x2d.dtype.itemsize            # x tile (double buffered)
        + 2 * Din * fb * w1_p.dtype.itemsize         # W1 F-chunk
        + 2 * fb * b1_p.dtype.itemsize               # b1 F-chunk
        + 2 * fb * Dout_p * w2_p.dtype.itemsize      # W2 F-chunk
        + 2 * Dout_p * b2_p.dtype.itemsize           # b2
        + 2 * rt * Dout_p * out_dt.itemsize          # output tile (double buffered)
        + rt * Dout_p * 4                            # f32 accumulator scratch
        + rt * fb * 6                                # f32 hidden + bf16 copy
    )
    vmem_limit = int(min(int(vmem_cap), max(int(footprint * 1.25), 32 * 2**20)))

    out2d = pl.pallas_call(
        _ffn_kernel,
        out_shape=jax.ShapeDtypeStruct((M, Dout_p), out_dt),
        grid_spec=pltpu.PrefetchScalarGridSpec(
            num_scalar_prefetch=0,
            grid=(n_m, n_f),                                   # reduction (F) axis last
            in_specs=[
                pl.BlockSpec((rt, Din), lambda i, f: (i, 0)),      # x rows (f-invariant)
                pl.BlockSpec((Din, fb), lambda i, f: (0, f)),      # W1 F-chunk (bf16)
                pl.BlockSpec((1, fb), lambda i, f: (0, f)),        # b1 F-chunk (f32)
                pl.BlockSpec((fb, Dout_p), lambda i, f: (f, 0)),   # W2 F-chunk (bf16)
                pl.BlockSpec((1, Dout_p), lambda i, f: (0, 0)),    # b2 (f32, grid-invariant)
            ],
            out_specs=pl.BlockSpec((rt, Dout_p), lambda i, f: (i, 0)),
            scratch_shapes=[pltpu.VMEM((rt, Dout_p), jnp.float32)],
        ),
        compiler_params=pltpu.CompilerParams(
            dimension_semantics=("parallel", "arbitrary"),
            vmem_limit_bytes=vmem_limit,
        ),
    )(x2d, w1_p, b1_p, w2_p, b2_p)

    return out2d[:, :out_features].reshape(B, S, out_features)


def make_positionwise_feed_forward(w1, b1, w2, b2, *, out_dtype=None,
                                   compute_dtype=jnp.bfloat16):
    """One-time parameter prep (pad + cast, hoisted out of the per-call path).

    w1: [Din, F], b1: [F], w2: [F, Dout], b2: [Dout] -- weights stored [in, out]
    (already transposed relative to PyTorch's [out, in]).
    Returns forward(x: [B, S, Din]) -> [B, S, Dout].
    """
    cfg = _tpu_defaults()
    lane = cfg["lane"]
    Din, F = w1.shape
    Dout = w2.shape[1]

    # F chunk: multiple of `lane`; pad F so the chunk divides it exactly.  The zero
    # padding is exact: padded hidden columns are relu(0 + 0) = 0 and contribute 0.
    F_l = _round_up(F, lane)
    f_chunk = min(int(cfg["f_chunk"]), F_l)
    F_pad = _round_up(F_l, f_chunk)
    Dout_p = _round_up(Dout, lane)

    w1_p = jnp.pad(w1.astype(compute_dtype), ((0, 0), (0, F_pad - F)))
    b1_p = jnp.pad(b1.astype(jnp.float32), ((0, F_pad - F),)).reshape(1, F_pad)
    w2_p = jnp.pad(w2.astype(compute_dtype), ((0, F_pad - F), (0, Dout_p - Dout)))
    b2_p = jnp.pad(b2.astype(jnp.float32), ((0, Dout_p - Dout),)).reshape(1, Dout_p)
    w1_p, b1_p, w2_p, b2_p = jax.block_until_ready((w1_p, b1_p, w2_p, b2_p))

    def forward(x):
        return _ffn_apply(
            x, w1_p, b1_p, w2_p, b2_p,
            out_features=Dout,
            row_tile=int(cfg["row_tile"]),
            f_chunk=f_chunk,
            vmem_cap=int(cfg["vmem_cap"]),
            out_dtype=(x.dtype if out_dtype is None else jnp.dtype(out_dtype)),
        )

    return forward


def _reference_f32(x, w1, b1, w2, b2):
    h = jnp.maximum(jnp.einsum("bsd,df->bsf", x, w1) + b1, 0.0)
    return jnp.maximum(jnp.einsum("bsf,fo->bso", h, w2) + b2, 0.0)


def _reference_bf16(x, w1, b1, w2, b2):
    # Same precision policy as the kernel: bf16 matmul inputs, f32 accumulation,
    # f32 bias-add / ReLU.
    xb = x.astype(jnp.bfloat16)
    h = jnp.einsum("bsd,df->bsf", xb, w1.astype(jnp.bfloat16),
                   preferred_element_type=jnp.float32)
    h = jnp.maximum(h + b1.astype(jnp.float32), 0.0)
    y = jnp.einsum("bsf,fo->bso", h.astype(jnp.bfloat16), w2.astype(jnp.bfloat16),
                   preferred_element_type=jnp.float32)
    y = jnp.maximum(y + b2.astype(jnp.float32), 0.0)
    return y.astype(x.dtype)


if __name__ == "__main__":
    # Small shapes consistent with the module: [batch, seq, input_depth]
    B, S = 2, 8
    input_depth, filter_size, output_depth = 32, 64, 32

    key = jax.random.PRNGKey(0)
    kx, k1, k2, k3, k4 = jax.random.split(key, 5)

    x = jax.random.normal(kx, (B, S, input_depth), dtype=jnp.float32)

    # Deterministic nn.Linear-like init, stored as [in, out] (transposed vs PyTorch).
    lim1 = 1.0 / (input_depth ** 0.5)
    w1 = jax.random.uniform(k1, (input_depth, filter_size), jnp.float32, -lim1, lim1)
    b1 = jax.random.uniform(k2, (filter_size,), jnp.float32, -lim1, lim1)
    lim2 = 1.0 / (filter_size ** 0.5)
    w2 = jax.random.uniform(k3, (filter_size, output_depth), jnp.float32, -lim2, lim2)
    b2 = jax.random.uniform(k4, (output_depth,), jnp.float32, -lim2, lim2)

    ffn = make_positionwise_feed_forward(w1, b1, w2, b2)
    out = jax.block_until_ready(ffn(x))
    assert out.shape == (B, S, output_depth)

    # Match against a reference with the same bf16-matmul / f32-accumulate policy.
    ref_bf16 = _reference_bf16(x, w1, b1, w2, b2)
    assert jnp.allclose(out, ref_bf16, atol=1e-2, rtol=1e-2), "mismatch vs bf16 reference"

    # Loose check against full-f32 PyTorch-equivalent math (bf16 rounding only).
    ref_f32 = _reference_f32(x, w1, b1, w2, b2)
    assert jnp.allclose(out, ref_f32, atol=3e-2, rtol=3e-2), "mismatch vs f32 reference"

    print("KERNEL_OK")
</pallas_src>

<mosaic_0001>
module attributes {stable_mosaic.version = 11 : i64} {
  func.func @_ffn_kernel(%arg0: i32, %arg1: i32, %arg2: memref<8x32xf32, #tpu.memory_space<vmem>>, %arg3: memref<32x256xbf16, #tpu.memory_space<vmem>>, %arg4: memref<1x256xf32, #tpu.memory_space<vmem>>, %arg5: memref<256x256xbf16, #tpu.memory_space<vmem>>, %arg6: memref<1x256xf32, #tpu.memory_space<vmem>>, %arg7: memref<8x256xf32, #tpu.memory_space<vmem>>, %arg8: memref<8x256xf32, #tpu.memory_space<vmem>>) attributes {dimension_semantics = [#tpu.dimension_semantics<parallel>, #tpu.dimension_semantics<arbitrary>], iteration_bounds = array<i64: 2, 1>, scalar_prefetch = 0 : i64, scratch_operands = 1 : i64, tpu.core_type = #tpu.core_type<tc>, window_params = [{transform_indices = @transform_0, window_bounds = array<i64: 8, 32>}, {transform_indices = @transform_1, window_bounds = array<i64: 32, 256>}, {transform_indices = @transform_2, window_bounds = array<i64: 1, 256>}, {transform_indices = @transform_3, window_bounds = array<i64: 256, 256>}, {pipeline_mode = #tpu.pipeline_mode<synchronous>, transform_indices = @transform_4, window_bounds = array<i64: 1, 256>}, {transform_indices = @transform_5, window_bounds = array<i64: 8, 256>}]} {
    %c0_i32 = arith.constant 0 : i32
    %0 = arith.cmpi eq, %arg1, %c0_i32 : i32
    %1 = arith.extui %0 : i1 to i32
    %c0_i32_0 = arith.constant 0 : i32
    %2 = arith.cmpi ne, %1, %c0_i32_0 : i32
    scf.if %2 {
      %cst_16 = arith.constant 0.000000e+00 : f32
      %21 = vector.broadcast %cst_16 : f32 to vector<8x256xf32>
      %c0_17 = arith.constant 0 : index
      %c0_18 = arith.constant 0 : index
      %22 = vector.load %arg8[%c0_17, %c0_18] : memref<8x256xf32, #tpu.memory_space<vmem>>, vector<8x256xf32>
      tpu.vector_store %arg8[%c0_17, %c0_18], %21 {strides = array<i32>} : memref<8x256xf32, #tpu.memory_space<vmem>>, vector<8x256xf32>,
    } else {
    }
    %c0 = arith.constant 0 : index
    %c0_1 = arith.constant 0 : index
    %3 = vector.load %arg2[%c0, %c0_1] : memref<8x32xf32, #tpu.memory_space<vmem>>, vector<8x32xf32>
    %4 = arith.truncf %3 : vector<8x32xf32> to vector<8x32xbf16>
    %c0_2 = arith.constant 0 : index
    %c0_3 = arith.constant 0 : index
    %5 = vector.load %arg3[%c0_2, %c0_3] : memref<32x256xbf16, #tpu.memory_space<vmem>>, vector<32x256xbf16>
    %cst = arith.constant dense<0.000000e+00> : vector<8x256xf32>
    %6 = tpu.matmul %4, %5, %cst {dimension_numbers = #tpu.dot_dimension_numbers<[1], [0], [0], [1], [0, 0, 1, 1], [], []>} : vector<8x32xbf16>, vector<32x256xbf16>, vector<8x256xf32> -> vector<8x256xf32>
    %c0_4 = arith.constant 0 : index
    %c0_5 = arith.constant 0 : index
    %7 = vector.load %arg4[%c0_4, %c0_5] : memref<1x256xf32, #tpu.memory_space<vmem>>, vector<1x256xf32>
    %8 = vector.broadcast %7 : vector<1x256xf32> to vector<8x256xf32>
    %9 = arith.addf %6, %8 : vector<8x256xf32>
    %cst_6 = arith.constant 0.000000e+00 : f32
    %10 = vector.broadcast %cst_6 : f32 to vector<8x256xf32>
    %11 = arith.maximumf %9, %10 : vector<8x256xf32>
    %c0_7 = arith.constant 0 : index
    %c0_8 = arith.constant 0 : index
    %12 = vector.load %arg8[%c0_7, %c0_8] : memref<8x256xf32, #tpu.memory_space<vmem>>, vector<8x256xf32>
    %13 = arith.truncf %11 : vector<8x256xf32> to vector<8x256xbf16>
    %c0_9 = arith.constant 0 : index
    %c0_10 = arith.constant 0 : index
    %14 = vector.load %arg5[%c0_9, %c0_10] : memref<256x256xbf16, #tpu.memory_space<vmem>>, vector<256x256xbf16>
    %cst_11 = arith.constant dense<0.000000e+00> : vector<8x256xf32>
    %15 = tpu.matmul %13, %14, %cst_11 {dimension_numbers = #tpu.dot_dimension_numbers<[1], [0], [0], [1], [0, 0, 1, 1], [], []>} : vector<8x256xbf16>, vector<256x256xbf16>, vector<8x256xf32> -> vector<8x256xf32>
    %16 = arith.addf %12, %15 : vector<8x256xf32>
    %c0_12 = arith.constant 0 : index
    %c0_13 = arith.constant 0 : index
    %17 = vector.load %arg8[%c0_12, %c0_13] : memref<8x256xf32, #tpu.memory_space<vmem>>, vector<8x256xf32>
    tpu.vector_store %arg8[%c0_12, %c0_13], %16 {strides = array<i32>} : memref<8x256xf32, #tpu.memory_space<vmem>>, vector<8x256xf32>,
    %c0_i32_14 = arith.constant 0 : i32
    %18 = arith.cmpi eq, %arg1, %c0_i32_14 : i32
    %19 = arith.extui %18 : i1 to i32
    %c0_i32_15 = arith.constant 0 : i32
    %20 = arith.cmpi ne, %19, %c0_i32_15 : i32
    scf.if %20 {
      %c0_16 = arith.constant 0 : index
      %c0_17 = arith.constant 0 : index
      %21 = vector.load %arg8[%c0_16, %c0_17] : memref<8x256xf32, #tpu.memory_space<vmem>>, vector<8x256xf32>
      %c0_18 = arith.constant 0 : index
      %c0_19 = arith.constant 0 : index
      %22 = vector.load %arg6[%c0_18, %c0_19] : memref<1x256xf32, #tpu.memory_space<vmem>>, vector<1x256xf32>
      %23 = vector.broadcast %22 : vector<1x256xf32> to vector<8x256xf32>
      %24 = arith.addf %21, %23 : vector<8x256xf32>
      %cst_20 = arith.constant 0.000000e+00 : f32
      %25 = vector.broadcast %cst_20 : f32 to vector<8x256xf32>
      %26 = arith.maximumf %24, %25 : vector<8x256xf32>
      %c0_21 = arith.constant 0 : index
      %c0_22 = arith.constant 0 : index
      %27 = vector.load %arg7[%c0_21, %c0_22] : memref<8x256xf32, #tpu.memory_space<vmem>>, vector<8x256xf32>
      tpu.vector_store %arg7[%c0_21, %c0_22], %26 {strides = array<i32>} : memref<8x256xf32, #tpu.memory_space<vmem>>, vector<8x256xf32>,
    } else {
    }
    return
  }
  func.func @transform_0(%arg0: i32, %arg1: i32) -> (i32, i32) {
    %c0_i32 = arith.constant 0 : i32
    %c0_i32_0 = arith.constant 0 : i32
    return %arg0, %c0_i32 : i32, i32
  }
  func.func @transform_1(%arg0: i32, %arg1: i32) -> (i32, i32) {
    %c0_i32 = arith.constant 0 : i32
    %c0_i32_0 = arith.constant 0 : i32
    return %c0_i32, %arg1 : i32, i32
  }
  func.func @transform_2(%arg0: i32, %arg1: i32) -> (i32, i32) {
    %c0_i32 = arith.constant 0 : i32
    %c0_i32_0 = arith.constant 0 : i32
    return %c0_i32, %arg1 : i32, i32
  }
  func.func @transform_3(%arg0: i32, %arg1: i32) -> (i32, i32) {
    %c0_i32 = arith.constant 0 : i32
    %c0_i32_0 = arith.constant 0 : i32
    return %arg1, %c0_i32 : i32, i32
  }
  func.func @transform_4(%arg0: i32, %arg1: i32) -> (i32, i32) {
    %c0_i32 = arith.constant 0 : i32
    %c0_i32_0 = arith.constant 0 : i32
    %c0_i32_1 = arith.constant 0 : i32
    return %c0_i32, %c0_i32_0 : i32, i32
  }
  func.func @transform_5(%arg0: i32, %arg1: i32) -> (i32, i32) {
    %c0_i32 = arith.constant 0 : i32
    %c0_i32_0 = arith.constant 0 : i32
    return %arg0, %c0_i32 : i32, i32
  }
}

</mosaic_0001>

<llo_original>
// kernel: _ffn_apply.1
$region0: #{_ffn_apply.1}
  #allocation0 [shape = 'u32[]', space=smem, size = 0x4, offset = 0x4, fixed_abs, tag = 'smem constant byte address 0x4 - core index']
  #allocation1 [shape = 'u32[144,128]{1,0:T(1,128)}', space=vmem, size = 0x12000, scoped, tag = 'internal scratch']
  #allocation2 [shape = 'f32[8,256]{1,0:T(8,128)}', space=vmem, size = 0x2000, scoped, tag = 'scratch operand']
  %s0 = inlined_call_operand.hbm [shape: f32[16,32], index: 0, kind: input, shape index: {}]
  %s1 = inlined_call_operand.hbm [shape: bf16[32,256], index: 1, kind: input, shape index: {}]
  %s2 = inlined_call_operand.vmem [shape: f32[1,256], index: 2, kind: input, shape index: {}]
  %s3 = inlined_call_operand.hbm [shape: bf16[256,256], index: 3, kind: input, shape index: {}]
  %s4 = inlined_call_operand.vmem [shape: f32[1,256], index: 4, kind: input, shape index: {}]
  %s5 = inlined_call_operand.vmem [shape: f32[16,256], index: 5, kind: output, shape index: {}]
  %s6 = sld [smem:[#allocation0]]
  $region73: #{_ffn_apply.1} parent=0
    _
  %s8 = ssub.s32 1, %s6
  %s9 = scalar_select 0, %s8, %s6
  $region1: #{_ffn_apply.1} parent=0
    #allocation3 [shape = 'u8[8192]{0}', space=vmem, size = 0x2000, scoped, tag = 'input window, operand 0']
    #allocation4 [shape = 's32[2]{0}', space=sflag, size = 0x8, scoped, tag = 'scoped memory for _ffn_apply.1']
    #allocation5 [shape = 'u8[16384]{0}', space=vmem, size = 0x4000, scoped, tag = 'input window, operand 1, single buffered']
    #allocation6 [shape = 's32[1]{0}', space=sflag, size = 0x4, scoped, tag = 'scoped memory for _ffn_apply.1']
    #allocation7 [shape = 'u8[131072]{0}', space=vmem, size = 0x20000, scoped, tag = 'input window, operand 3, single buffered']
    %10 = vsyncpa [#allocation4], 0
    %s11 = scalar_lea.sflag [#allocation4], 1
    %12 = vsyncpa %s11, 0
    %13 = vsyncpa [#allocation6], 0
    loop: start=0, step=1, limit=4
    $region2: #{_ffn_apply.1} parent=1 // loop_pre_header
      _
    $region3: #{_ffn_apply.1} parent=1 // loop_header
      %s15 = sphi 0, %s19
      %p16 = scmp.ge.s32.totalorder %s15, 4
      %s22 = sphi 0, %s34
      %s23 = sphi 0, %s30
      %s24 = sphi 0, %s22
      %s25 = sphi 0, %s23
      %s26 = sphi 0, %s24
      %s27 = sphi 0, %s25
      %s37 = sphi 0, %s39
      %s40 = sphi 0, %s37
      %s41 = sphi 0, %s40
      %s57 = sphi 0, %s41
      %s63 = sphi 0, %s65
      %s66 = sphi 0, %s63
      %s67 = sphi 0, %s66
      %s83 = sphi 0, %s67
      %s89 = sphi 0, %s91
      %s92 = sphi 0, %s89
      %s93 = sphi 0, %s92
      %s109 = sphi 0, %s93
      %s115 = sphi 0, %s117
      %s118 = sphi 0, %s115
      %s119 = sphi 0, %s118
      %s135 = sphi 0, %s119
      %s139 = sphi 0, %s139
      %s141 = sphi 0, %s139
      %s142 = sphi 0, %s141
      %s156 = sphi 0, %s142
      %s162 = sphi 0, %s164
      %s165 = sphi 0, %s162
      %s166 = sphi 0, %s165
      %s182 = sphi 0, %s166
    $region4: #{_ffn_apply.1} parent=1 // loop_header_branch
      %18 = sbr.rel (%p16) target = $region8
    $region5: #{_ffn_apply.1} parent=1 // loop_body
      %s20 = ssub.s32 %s15, 1
      %s21 = ssub.s32 %s15, 2
      %s28 = sadd.s32 1, %s23
      %p29 = scmp.ge.s32.totalorder %s28, 1
      %s30 = scalar_select %p29, 0, %s28
      %s31 = sadd.s32 1, %s22
      %s32 = scalar_select %p29, %s31, %s22
      %p33 = scmp.ge.s32.totalorder %s32, 2
      %s34 = scalar_select %p33, 0, %s32
      %s35 = ssub.s32 %s22, %s34
      %p36 = scmp.eq.s32.totalorder %s35, 0
      %s38 = sadd.s32 %s37, 1
      %s39 = scalar_select %p36, %s37, %s38
      %p42 = pneg %p36
      %p43 = scmp.eq.s32.totalorder %s15, 1
      %p44 = por %p42, %p43
      %p45 = scmp.ne.s32.totalorder %s37, %s40
      %p46 = scmp.eq.s32.totalorder %s15, 0
      %p47 = por %p45, %p46
      %p48 = scmp.ne.s32.totalorder %s37, %s40
      %p49 = scmp.eq.s32.totalorder %s20, 1
      %p50 = por %p48, %p49
      %p51 = scmp.ne.s32.totalorder %s40, %s41
      %p52 = scmp.eq.s32.totalorder %s20, 0
      %p53 = por %p51, %p52
      %p54 = scmp.ne.s32.totalorder %s40, %s41
      %p55 = scmp.eq.s32.totalorder %s21, 1
      %p56 = por %p54, %p55
      %p58 = scmp.ne.s32.totalorder %s41, %s57
      %p59 = scmp.eq.s32.totalorder %s21, 0
      %p60 = por %p58, %p59
      %s61 = ssub.s32 %s23, %s30
      %p62 = scmp.eq.s32.totalorder %s61, 0
      %s64 = sadd.s32 %s63, 1
      %s65 = scalar_select %p62, %s63, %s64
      %p68 = pneg %p62
      %p69 = scmp.eq.s32.totalorder %s15, 1
      %p70 = por %p68, %p69
      %p71 = scmp.ne.s32.totalorder %s63, %s66
      %p72 = scmp.eq.s32.totalorder %s15, 0
      %p73 = por %p71, %p72
      %p74 = scmp.ne.s32.totalorder %s63, %s66
      %p75 = scmp.eq.s32.totalorder %s20, 1
      %p76 = por %p74, %p75
      %p77 = scmp.ne.s32.totalorder %s66, %s67
      %p78 = scmp.eq.s32.totalorder %s20, 0
      %p79 = por %p77, %p78
      %p80 = scmp.ne.s32.totalorder %s66, %s67
      %p81 = scmp.eq.s32.totalorder %s21, 1
      %p82 = por %p80, %p81
      %p84 = scmp.ne.s32.totalorder %s67, %s83
      %p85 = scmp.eq.s32.totalorder %s21, 0
      %p86 = por %p84, %p85
      %s87 = ssub.s32 %s23, %s30
      %p88 = scmp.eq.s32.totalorder %s87, 0
      %s90 = sadd.s32 %s89, 1
      %s91 = scalar_select %p88, %s89, %s90
      %p94 = pneg %p88
      %p95 = scmp.eq.s32.totalorder %s15, 1
      %p96 = por %p94, %p95
      %p97 = scmp.ne.s32.totalorder %s89, %s92
      %p98 = scmp.eq.s32.totalorder %s15, 0
      %p99 = por %p97, %p98
      %p100 = scmp.ne.s32.totalorder %s89, %s92
      %p101 = scmp.eq.s32.totalorder %s20, 1
      %p102 = por %p100, %p101
      %p103 = scmp.ne.s32.totalorder %s92, %s93
      %p104 = scmp.eq.s32.totalorder %s20, 0
      %p105 = por %p103, %p104
      %p106 = scmp.ne.s32.totalorder %s92, %s93
      %p107 = scmp.eq.s32.totalorder %s21, 1
      %p108 = por %p106, %p107
      %p110 = scmp.ne.s32.totalorder %s93, %s109
      %p111 = scmp.eq.s32.totalorder %s21, 0
      %p112 = por %p110, %p111
      %s113 = ssub.s32 %s23, %s30
      %p114 = scmp.eq.s32.totalorder %s113, 0
      %s116 = sadd.s32 %s115, 1
      %s117 = scalar_select %p114, %s115, %s116
      %p120 = pneg %p114
      %p121 = scmp.eq.s32.totalorder %s15, 1
      %p122 = por %p120, %p121
      %p123 = scmp.ne.s32.totalorder %s115, %s118
      %p124 = scmp.eq.s32.totalorder %s15, 0
      %p125 = por %p123, %p124
      %p126 = scmp.ne.s32.totalorder %s115, %s118
      %p127 = scmp.eq.s32.totalorder %s20, 1
      %p128 = por %p126, %p127
      %p129 = scmp.ne.s32.totalorder %s118, %s119
      %p130 = scmp.eq.s32.totalorder %s20, 0
      %p131 = por %p129, %p130
      %p132 = scmp.ne.s32.totalorder %s118, %s119
      %p133 = scmp.eq.s32.totalorder %s21, 1
      %p134 = por %p132, %p133
      %p136 = scmp.ne.s32.totalorder %s119, %s135
      %p137 = scmp.eq.s32.totalorder %s21, 0
      %p138 = por %p136, %p137
      %s140 = sadd.s32 %s139, 1
      %p143 = scmp.eq.s32.totalorder %s15, 1
      %p144 = scmp.ne.s32.totalorder %s139, %s141
      %p145 = scmp.eq.s32.totalorder %s15, 0
      %p146 = por %p144, %p145
      %p147 = scmp.ne.s32.totalorder %s139, %s141
      %p148 = scmp.eq.s32.totalorder %s20, 1
      %p149 = por %p147, %p148
      %p150 = scmp.ne.s32.totalorder %s141, %s142
      %p151 = scmp.eq.s32.totalorder %s20, 0
      %p152 = por %p150, %p151
      %p153 = scmp.ne.s32.totalorder %s141, %s142
      %p154 = scmp.eq.s32.totalorder %s21, 1
      %p155 = por %p153, %p154
      %p157 = scmp.ne.s32.totalorder %s142, %s156
      %p158 = scmp.eq.s32.totalorder %s21, 0
      %p159 = por %p157, %p158
      %s160 = ssub.s32 %s22, %s34
      %p161 = scmp.eq.s32.totalorder %s160, 0
      %s163 = sadd.s32 %s162, 1
      %s164 = scalar_select %p161, %s162, %s163
      %p167 = pneg %p161
      %p168 = scmp.eq.s32.totalorder %s15, 1
      %p169 = por %p167, %p168
      %p170 = scmp.ne.s32.totalorder %s162, %s165
      %p171 = scmp.eq.s32.totalorder %s15, 0
      %p172 = por %p170, %p171
      %p173 = scmp.ne.s32.totalorder %s162, %s165
      %p174 = scmp.eq.s32.totalorder %s20, 1
      %p175 = por %p173, %p174
      %p176 = scmp.ne.s32.totalorder %s165, %s166
      %p177 = scmp.eq.s32.totalorder %s20, 0
      %p178 = por %p176, %p177
      %p179 = scmp.ne.s32.totalorder %s165, %s166
      %p180 = scmp.eq.s32.totalorder %s21, 1
      %p181 = por %p179, %p180
      %p183 = scmp.ne.s32.totalorder %s166, %s182
      %p184 = scmp.eq.s32.totalorder %s21, 0
      %p185 = por %p183, %p184
      %p186 = scmp.le.s32.totalorder 1, %s15
      %p187 = scmp.lt.s32.totalorder %s15, 3
      %p188 = pnand %p186, %p187
      %p189 = pneg %p188
      // Predicated region
      $region9: #{_ffn_apply.1} parent=5 // pred_check
        _
      $region10: #{_ffn_apply.1} parent=5 // pred_check_branch
        %191 = sbr.rel (%p188) target = $region12
      $region11: #{_ffn_apply.1} parent=5 // pred_region
        %s192 = ssub.s32 %s15, 1
        // Predicated region
        $region13: #{_ffn_apply.1} parent=11 // pred_check
          %p193 = pneg %p79
        $region14: #{_ffn_apply.1} parent=11 // pred_check_branch
          %195 = sbr.rel (%p193) target = $region16
        $region15: #{_ffn_apply.1} parent=11 // pred_region
          %s196 = smul.u32 2, %s25
          %s198 = ssub.s32 512, 512
          %199 = vsyncadd [#allocation6], %s198
          %s200 = smul.addr %s196, 64
          %s201 = scalar_lea.hbm %s1, %s200
          %s202 = sshll.u32 [#allocation5], 4
          %s203 = int_to_ptr.vmem [resolvable:$true] %s202
          %208 = dma.hbm_to_vmem [thread:$0]  %s201, 512, %s203, [#allocation6], 128, 128, 8
        $region16: #{_ffn_apply.1} parent=11 // pred_fallthru
          _
        // Predicated region
        $region17: #{_ffn_apply.1} parent=11 // pred_check
          %p209 = pneg %p105
        $region18: #{_ffn_apply.1} parent=11 // pred_check_branch
          %211 = sbr.rel (%p209) target = $region20
        $region19: #{_ffn_apply.1} parent=11 // pred_region
          %s212 = smul.u32 2, %s25
          %p213 = scmp.lt.s32.totalorder %s212, 1
          %s214 = scalar_select %p213, %s212, 1
          %s215 = scalar_lea.vmem %s2, %s214
          %s216 = smul.u32 2, %s25
        $region20: #{_ffn_apply.1} parent=11 // pred_fallthru
          _
        // Predicated region
        $region21: #{_ffn_apply.1} parent=11 // pred_check
          %p217 = pneg %p131
        $region22: #{_ffn_apply.1} parent=11 // pred_check_branch
          %219 = sbr.rel (%p217) target = $region24
        $region23: #{_ffn_apply.1} parent=11 // pred_region
          %s220 = smul.u32 32, %s25
          %s222 = ssub.s32 4096, 4096
          %223 = vsyncadd [#allocation6], %s222
          %s224 = smul.addr %s220, 2
          %s225 = smul.addr %s224, 64
          %s226 = scalar_lea.hbm %s3, %s225
          %s227 = sshll.u32 [#allocation7], 4
          %s228 = int_to_ptr.vmem [resolvable:$true] %s227
          %233 = dma.hbm_to_vmem [thread:$0]  %s226, 4096, %s228, [#allocation6], 128, 128, 8
        $region24: #{_ffn_apply.1} parent=11 // pred_fallthru
          _
        // Predicated region
        $region25: #{_ffn_apply.1} parent=11 // pred_check
          %p234 = pneg %p152
        $region26: #{_ffn_apply.1} parent=11 // pred_check_branch
          %236 = sbr.rel (%p234) target = $region28
        $region27: #{_ffn_apply.1} parent=11 // pred_region
          _
        $region28: #{_ffn_apply.1} parent=11 // pred_fallthru
          _
      $region12: #{_ffn_apply.1} parent=5 // pred_fallthru
        _
      %p237 = scmp.lt.s32.totalorder %s15, 2
      // Predicated region
      $region29: #{_ffn_apply.1} parent=5 // pred_check
        %p238 = pneg %p237
      $region30: #{_ffn_apply.1} parent=5 // pred_check_branch
        %240 = sbr.rel (%p238) target = $region32
      $region31: #{_ffn_apply.1} parent=5 // pred_region
        // Predicated region
        $region33: #{_ffn_apply.1} parent=31 // pred_check
          %p241 = pneg %p47
        $region34: #{_ffn_apply.1} parent=31 // pred_check_branch
          %243 = sbr.rel (%p241) target = $region36
        $region35: #{_ffn_apply.1} parent=31 // pred_region
          %s244 = sand.u32 %s37, 1
          %s245 = scalar_lea.sflag [#allocation4], %s244
          %s246 = sand.u32 %s37, 1
          %s247 = smul.addr %s246, 8
          %s248 = scalar_lea.vmem [#allocation3], %s247
          %s250 = ssub.s32 128, 128
          %251 = vsyncadd %s245, %s250
          %s252 = smul.addr %s22, 128
          %s253 = scalar_lea.hbm %s0, %s252
          %s255 = sshll.u32 %s248, 4
          %s256 = int_to_ptr.vmem [resolvable:$true] %s255
          %258 = dma.hbm_to_vmem [thread:$0]  %s253, 128, %s256, %s245
        $region36: #{_ffn_apply.1} parent=31 // pred_fallthru
          _
      $region32: #{_ffn_apply.1} parent=5 // pred_fallthru
        _
      %p259 = scmp.le.s32.totalorder 1, %s15
      %p260 = scmp.lt.s32.totalorder %s15, 3
      %p261 = pnand %p259, %p260
      %p262 = pneg %p261
      // Predicated region
      $region37: #{_ffn_apply.1} parent=5 // pred_check
        _
      $region38: #{_ffn_apply.1} parent=5 // pred_check_branch
        %264 = sbr.rel (%p261) target = $region40
      $region39: #{_ffn_apply.1} parent=5 // pred_region
        %s265 = ssub.s32 %s15, 1
        %s266 = sand.u32 %s40, 1
        %s267 = scalar_lea.sflag [#allocation4], %s266
        %s268 = sand.u32 %s40, 1
        %s269 = smul.addr %s268, 8
        %s270 = scalar_lea.vmem [#allocation3], %s269
        // Predicated region
        $region41: #{_ffn_apply.1} parent=39 // pred_check
          %p271 = pneg %p53
        $region42: #{_ffn_apply.1} parent=39 // pred_check_branch
          %273 = sbr.rel (%p271) target = $region44
        $region43: #{_ffn_apply.1} parent=39 // pred_region
          %274 = dma.done %s267, 128
        $region44: #{_ffn_apply.1} parent=39 // pred_fallthru
          _
        // Predicated region
        $region45: #{_ffn_apply.1} parent=39 // pred_check
          %p275 = pneg %p79
        $region46: #{_ffn_apply.1} parent=39 // pred_check_branch
          %277 = sbr.rel (%p275) target = $region48
        $region47: #{_ffn_apply.1} parent=39 // pred_region
          %278 = dma.done [#allocation6], 512
        $region48: #{_ffn_apply.1} parent=39 // pred_fallthru
          _
        // Predicated region
        $region49: #{_ffn_apply.1} parent=39 // pred_check
          %p279 = pneg %p131
        $region50: #{_ffn_apply.1} parent=39 // pred_check_branch
          %281 = sbr.rel (%p279) target = $region52
        $region51: #{_ffn_apply.1} parent=39 // pred_region
          %282 = dma.done [#allocation6], 4096
        $region52: #{_ffn_apply.1} parent=39 // pred_fallthru
          _
        %s283 = sand.u32 %s40, 1
        %s284 = scalar_lea.sflag [#allocation4], %s283
        %s285 = sand.u32 %s40, 1
        %s286 = smul.addr %s285, 8
        %s287 = scalar_lea.vmem [#allocation3], %s286
        %p288 = pneg %p53
        %p289 = pneg %p50
        %p290 = pneg %p79
        %p291 = pneg %p76
        %s292 = smul.u32 2, %s25
        %p293 = scmp.lt.s32.totalorder %s292, 1
        %s294 = scalar_select %p293, %s292, 1
        %s295 = scalar_lea.vmem %s2, %s294
        %p296 = pneg %p105
        %p297 = pneg %p102
        %p298 = pneg %p131
        %p299 = pneg %p128
        %p300 = pneg %p152
        %p301 = pneg %p149
        %p302 = pneg %p178
        %p303 = pneg %p175
        %p304 = scmp.lt.s32.totalorder %s24, 1
        %s305 = scalar_select %p304, %s24, 1
        %s306 = smul.addr %s305, 2
        %s307 = smul.addr %s306, 8
        %s308 = scalar_lea.vmem %s5, %s307
        %s309 = smul.u32 2, %s25
        %s310 = smul.u32 2, %s25
        %p311 = scmp.lt.s32.totalorder %s310, 1
        %s312 = scalar_select %p311, %s310, 1
        %s313 = scalar_lea.vmem %s2, %s312
        %s314 = smul.u32 2, %s25
        %s315 = smul.u32 32, %s25
        %p316 = scmp.lt.s32.totalorder %s24, 1
        %s317 = scalar_select %p316, %s24, 1
        %s318 = smul.addr %s317, 2
        %s319 = smul.addr %s318, 8
        %s320 = scalar_lea.vmem %s5, %s319
        %p322 = scmp.eq.s32.totalorder %s25, 0
        // Predicated region
        $region53: #{_ffn_apply.1} parent=39 // pred_check
          %p323 = pneg %p322
        $region54: #{_ffn_apply.1} parent=39 // pred_check_branch
          %325 = sbr.rel (%p323) target = $region56
        $region55: #{_ffn_apply.1} parent=39 // pred_region
          %326 = vst [vmem:[#allocation2] sm:$0xff] 0.0
          %327 = vst [vmem:[#allocation2 + $0x8] sm:$0xff] 0.0
        $region56: #{_ffn_apply.1} parent=39 // pred_fallthru
          _
        %v328 = vld [vmem:[%s270] sm:$0xff]
        %v329 = vpack.c.bf16 %v328, %v328
        %v330 = vld [vmem:[#allocation5] sm:$0xff]
        %v331 = vld [vmem:[#allocation5 + $0x8] sm:$0xff]
        %v332 = vld [vmem:[#allocation5 + $0x10] sm:$0xff]
        %v333 = vld [vmem:[#allocation5 + $0x18] sm:$0xff]
        %v334 = vld [vmem:[%s313] sm:$0x3]
        %v336 = vlaneseq
        %v337 = vshrl.u32 %v336, 7
        %v338 = vsub.s32 0, %v337
        %v339 = vrot.slane %v334, %v338
        %v340 = vlaneseq
        %v341 = vshrl.u32 %v340, 7
        %v342 = vsub.s32 1, %v341
        %v343 = vrot.slane %v334, %v342
        %v350 = vunpack.c.l.b16 %v330
        %v351 = vunpack.c.h.b16 %v330
        %v352 = vunpack.c.l.b16 %v331
        %v353 = vunpack.c.h.b16 %v331
        %v354 = vunpack.c.l.b16 %v332
        %v355 = vunpack.c.h.b16 %v332
        %v356 = vunpack.c.l.b16 %v333
        %v357 = vunpack.c.h.b16 %v333
        %v358 = vpack.c.b16 %v352, %v350
        %v359 = vpack.c.b16 %v353, %v351
        %v360 = vpack.c.b16 %v356, %v354
        %v361 = vpack.c.b16 %v357, %v355
        %vm366 = vcmask 261120
        %v368 = vsel %vm366, %v329, 0
        %370 = vmatprep.subr.bf16.mxu0 %v359
        %371 = vmatpush1.bf16.msra.mxu0 %v358
        %372 = vmatprep.subr.bf16.mxu0 %v361
        %373 = vmatpush1.bf16.msra.mxu0 %v360
        %374 = vmatprep.subr.bf16.mxu0 0
        %375 = vmatpush1.bf16.msra.mxu0 0
        %376 = vmatprep.subr.bf16.mxu0 0
        %377 = vmatpush1.bf16.msra.mxu0 0
        %378 = vmatprep.subr.bf16.mxu0 0
        %379 = vmatpush1.bf16.msra.mxu0 0
        %380 = vmatprep.subr.bf16.mxu0 0
        %381 = vmatpush1.bf16.msra.mxu0 0
        %382 = vmatprep.subr.bf16.mxu0 0
        %383 = vmatpush1.bf16.msra.mxu0 0
        %384 = vmatprep.subr.bf16.mxu0 0
        %385 = vmatpush1.bf16.msra.mxu0 0
        %386 = vmatprep.subr.bf16.mxu0 0
        %387 = vmatpush1.bf16.msra.mxu0 0
        %388 = vmatprep.subr.bf16.mxu0 0
        %389 = vmatpush1.bf16.msra.mxu0 0
        %390 = vmatprep.subr.bf16.mxu0 0
        %391 = vmatpush1.bf16.msra.mxu0 0
        %392 = vmatprep.subr.bf16.mxu0 0
        %393 = vmatpush1.bf16.msra.mxu0 0
        %394 = vmatprep.subr.bf16.mxu0 0
        %395 = vmatpush1.bf16.msra.mxu0 0
        %396 = vmatprep.subr.bf16.mxu0 0
        %397 = vmatpush1.bf16.msra.mxu0 0
        %398 = vmatprep.subr.bf16.mxu0 0
        %399 = vmatpush1.bf16.msra.mxu0 0
        %400 = vmatprep.subr.bf16.mxu0 0
        %401 = vmatpush1.bf16.msra.mxu0 0
        %402 = vmatprep.mubr.bf16.mxu0 0
        %403 = vmatmul.mubr.bf16.gmra.mrb[0].mxu0 %v368
        %v404 = vpop.f32.mrb[0].mxu0
        %v405 = vadd.f32 %v339, %v404
        %v406 = vpop.f32.mrb[0].mxu0
        %v407 = vadd.f32 %v343, %v406
        %v408 = vpop.f32.mrb[0].mxu0
        %v409 = vpop.f32.mrb[0].mxu0
        %410 = vdwg.mxu0
        %v411 = vmax.f32 %v405, 0.0
        %v412 = vmax.f32 %v407, 0.0
        %v413 = vld [vmem:[#allocation2] sm:$0xff]
        %v414 = vld [vmem:[#allocation2 + $0x8] sm:$0xff]
        %v415 = vpack.c.bf16 %v411, %v411
        %v416 = vpack.c.bf16 %v412, %v412
        %v417 = vld [vmem:[#allocation7] sm:$0xff]
        %v418 = vld [vmem:[#allocation7 + $0x8] sm:$0xff]
        %v419 = vld [vmem:[#allocation7 + $0x10] sm:$0xff]
        %v420 = vld [vmem:[#allocation7 + $0x18] sm:$0xff]
        %v421 = vld [vmem:[#allocation7 + $0x20] sm:$0xff]
        %v422 = vld [vmem:[#allocation7 + $0x28] sm:$0xff]
        %v423 = vld [vmem:[#allocation7 + $0x30] sm:$0xff]
        %v424 = vld [vmem:[#allocation7 + $0x38] sm:$0xff]
        %v425 = vld [vmem:[#allocation7 + $0x40] sm:$0xff]
        %v426 = vld [vmem:[#allocation7 + $0x48] sm:$0xff]
        %v427 = vld [vmem:[#allocation7 + $0x50] sm:$0xff]
        %v428 = vld [vmem:[#allocation7 + $0x58] sm:$0xff]
        %v429 = vld [vmem:[#allocation7 + $0x60] sm:$0xff]
        %v430 = vld [vmem:[#allocation7 + $0x68] sm:$0xff]
        %v431 = vld [vmem:[#allocation7 + $0x70] sm:$0xff]
        %v432 = vld [vmem:[#allocation7 + $0x78] sm:$0xff]
        %v433 = vld [vmem:[#allocation7 + $0x80] sm:$0xff]
        %v434 = vld [vmem:[#allocation7 + $0x88] sm:$0xff]
        %v435 = vld [vmem:[#allocation7 + $0x90] sm:$0xff]
        %v436 = vld [vmem:[#allocation7 + $0x98] sm:$0xff]
        %v437 = vld [vmem:[#allocation7 + $0xa0] sm:$0xff]
        %v438 = vld [vmem:[#allocation7 + $0xa8] sm:$0xff]
        %v439 = vld [vmem:[#allocation7 + $0xb0] sm:$0xff]
        %v440 = vld [vmem:[#allocation7 + $0xb8] sm:$0xff]
        %v441 = vld [vmem:[#allocation7 + $0xc0] sm:$0xff]
        %v442 = vld [vmem:[#allocation7 + $0xc8] sm:$0xff]
        %v443 = vld [vmem:[#allocation7 + $0xd0] sm:$0xff]
        %v444 = vld [vmem:[#allocation7 + $0xd8] sm:$0xff]
        %v445 = vld [vmem:[#allocation7 + $0xe0] sm:$0xff]
        %v446 = vld [vmem:[#allocation7 + $0xe8] sm:$0xff]
        %v447 = vld [vmem:[#allocation7 + $0xf0] sm:$0xff]
        %v448 = vld [vmem:[#allocation7 + $0xf8] sm:$0xff]
        %v481 = vunpack.c.l.b16 %v417
        %v482 = vunpack.c.h.b16 %v417
        %v483 = vunpack.c.l.b16 %v418
        %v484 = vunpack.c.h.b16 %v418
        %v485 = vunpack.c.l.b16 %v419
        %v486 = vunpack.c.h.b16 %v419
        %v487 = vunpack.c.l.b16 %v420
        %v488 = vunpack.c.h.b16 %v420
        %v489 = vunpack.c.l.b16 %v421
        %v490 = vunpack.c.h.b16 %v421
        %v491 = vunpack.c.l.b16 %v422
        %v492 = vunpack.c.h.b16 %v422
        %v493 = vunpack.c.l.b16 %v423
        %v494 = vunpack.c.h.b16 %v423
        %v495 = vunpack.c.l.b16 %v424
        %v496 = vunpack.c.h.b16 %v424
        %v497 = vunpack.c.l.b16 %v425
        %v498 = vunpack.c.h.b16 %v425
        %v499 = vunpack.c.l.b16 %v426
        %v500 = vunpack.c.h.b16 %v426
        %v501 = vunpack.c.l.b16 %v427
        %v502 = vunpack.c.h.b16 %v427
        %v503 = vunpack.c.l.b16 %v428
        %v504 = vunpack.c.h.b16 %v428
        %v505 = vunpack.c.l.b16 %v429
        %v506 = vunpack.c.h.b16 %v429
        %v507 = vunpack.c.l.b16 %v430
        %v508 = vunpack.c.h.b16 %v430
        %v509 = vunpack.c.l.b16 %v431
        %v510 = vunpack.c.h.b16 %v431
        %v511 = vunpack.c.l.b16 %v432
        %v512 = vunpack.c.h.b16 %v432
        %v513 = vunpack.c.l.b16 %v433
        %v514 = vunpack.c.h.b16 %v433
        %v515 = vunpack.c.l.b16 %v434
        %v516 = vunpack.c.h.b16 %v434
        %v517 = vunpack.c.l.b16 %v435
        %v518 = vunpack.c.h.b16 %v435
        %v519 = vunpack.c.l.b16 %v436
        %v520 = vunpack.c.h.b16 %v436
        %v521 = vunpack.c.l.b16 %v437
        %v522 = vunpack.c.h.b16 %v437
        %v523 = vunpack.c.l.b16 %v438
        %v524 = vunpack.c.h.b16 %v438
        %v525 = vunpack.c.l.b16 %v439
        %v526 = vunpack.c.h.b16 %v439
        %v527 = vunpack.c.l.b16 %v440
        %v528 = vunpack.c.h.b16 %v440
        %v529 = vunpack.c.l.b16 %v441
        %v530 = vunpack.c.h.b16 %v441
        %v531 = vunpack.c.l.b16 %v442
        %v532 = vunpack.c.h.b16 %v442
        %v533 = vunpack.c.l.b16 %v443
        %v534 = vunpack.c.h.b16 %v443
        %v535 = vunpack.c.l.b16 %v444
        %v536 = vunpack.c.h.b16 %v444
        %v537 = vunpack.c.l.b16 %v445
        %v538 = vunpack.c.h.b16 %v445
        %v539 = vunpack.c.l.b16 %v446
        %v540 = vunpack.c.h.b16 %v446
        %v541 = vunpack.c.l.b16 %v447
        %v542 = vunpack.c.h.b16 %v447
        %v543 = vunpack.c.l.b16 %v448
        %v544 = vunpack.c.h.b16 %v448
        %v545 = vpack.c.b16 %v483, %v481
        %v546 = vpack.c.b16 %v484, %v482
        %v547 = vpack.c.b16 %v487, %v485
        %v548 = vpack.c.b16 %v488, %v486
        %v549 = vpack.c.b16 %v491, %v489
        %v550 = vpack.c.b16 %v492, %v490
        %v551 = vpack.c.b16 %v495, %v493
        %v552 = vpack.c.b16 %v496, %v494
        %v553 = vpack.c.b16 %v499, %v497
        %v554 = vpack.c.b16 %v500, %v498
        %v555 = vpack.c.b16 %v503, %v501
        %v556 = vpack.c.b16 %v504, %v502
        %v557 = vpack.c.b16 %v507, %v505
        %v558 = vpack.c.b16 %v508, %v506
        %v559 = vpack.c.b16 %v511, %v509
        %v560 = vpack.c.b16 %v512, %v510
        %v561 = vpack.c.b16 %v515, %v513
        %v562 = vpack.c.b16 %v516, %v514
        %v563 = vpack.c.b16 %v519, %v517
        %v564 = vpack.c.b16 %v520, %v518
        %v565 = vpack.c.b16 %v523, %v521
        %v566 = vpack.c.b16 %v524, %v522
        %v567 = vpack.c.b16 %v527, %v525
        %v568 = vpack.c.b16 %v528, %v526
        %v569 = vpack.c.b16 %v531, %v529
        %v570 = vpack.c.b16 %v532, %v530
        %v571 = vpack.c.b16 %v535, %v533
        %v572 = vpack.c.b16 %v536, %v534
        %v573 = vpack.c.b16 %v539, %v537
        %v574 = vpack.c.b16 %v540, %v538
        %v575 = vpack.c.b16 %v543, %v541
        %v576 = vpack.c.b16 %v544, %v542
        %609 = vmatprep.subr.bf16.mxu0 %v546
        %610 = vmatpush1.bf16.msra.mxu0 %v545
        %611 = vmatprep.subr.bf16.mxu0 %v548
        %612 = vmatpush1.bf16.msra.mxu0 %v547
        %613 = vmatprep.subr.bf16.mxu0 %v550
        %614 = vmatpush1.bf16.msra.mxu0 %v549
        %615 = vmatprep.subr.bf16.mxu0 %v552
        %616 = vmatpush1.bf16.msra.mxu0 %v551
        %617 = vmatprep.subr.bf16.mxu0 %v554
        %618 = vmatpush1.bf16.msra.mxu0 %v553
        %619 = vmatprep.subr.bf16.mxu0 %v556
        %620 = vmatpush1.bf16.msra.mxu0 %v555
        %621 = vmatprep.subr.bf16.mxu0 %v558
        %622 = vmatpush1.bf16.msra.mxu0 %v557
        %623 = vmatprep.subr.bf16.mxu0 %v560
        %624 = vmatpush1.bf16.msra.mxu0 %v559
        %625 = vmatprep.subr.bf16.mxu0 %v562
        %626 = vmatpush1.bf16.msra.mxu0 %v561
        %627 = vmatprep.subr.bf16.mxu0 %v564
        %628 = vmatpush1.bf16.msra.mxu0 %v563
        %629 = vmatprep.subr.bf16.mxu0 %v566
        %630 = vmatpush1.bf16.msra.mxu0 %v565
        %631 = vmatprep.subr.bf16.mxu0 %v568
        %632 = vmatpush1.bf16.msra.mxu0 %v567
        %633 = vmatprep.subr.bf16.mxu0 %v570
        %634 = vmatpush1.bf16.msra.mxu0 %v569
        %635 = vmatprep.subr.bf16.mxu0 %v572
        %636 = vmatpush1.bf16.msra.mxu0 %v571
        %637 = vmatprep.subr.bf16.mxu0 %v574
        %638 = vmatpush1.bf16.msra.mxu0 %v573
        %639 = vmatprep.subr.bf16.mxu0 %v576
        %640 = vmatpush1.bf16.msra.mxu0 %v575
        %641 = vmatprep.mubr.bf16.mxu0 %v416
        %642 = vmatmul.mubr.bf16.gmra.mrb[0].mxu0 %v415
        %v643 = vpop.f32.mrb[0].mxu0
        %v644 = vadd.f32 0.0, %v643
        %v645 = vpop.f32.mrb[0].mxu0
        %v646 = vadd.f32 0.0, %v645
        %v647 = vpop.f32.mrb[0].mxu0
        %v648 = vpop.f32.mrb[0].mxu0
        %649 = vdwg.mxu0
        %v650 = vadd.f32 %v413, %v644
        %v651 = vadd.f32 %v414, %v646
        %652 = vst [vmem:[#allocation2] sm:$0xff] %v650
        %653 = vst [vmem:[#allocation2 + $0x8] sm:$0xff] %v651
        // Predicated region
        $region57: #{_ffn_apply.1} parent=39 // pred_check
          %p654 = pneg %p322
        $region58: #{_ffn_apply.1} parent=39 // pred_check_branch
          %656 = sbr.rel (%p654) target = $region60
        $region59: #{_ffn_apply.1} parent=39 // pred_region
          %v657 = vld [vmem:[#allocation2] sm:$0xff]
          %v658 = vld [vmem:[#allocation2 + $0x8] sm:$0xff]
          %v659 = vld [vmem:[%s4] sm:$0x3]
          %v661 = vlaneseq
          %v662 = vshrl.u32 %v661, 7
          %v663 = vsub.s32 0, %v662
          %v664 = vrot.slane %v659, %v663
          %v665 = vlaneseq
          %v666 = vshrl.u32 %v665, 7
          %v667 = vsub.s32 1, %v666
          %v668 = vrot.slane %v659, %v667
          %v671 = vadd.f32 %v657, %v664
          %v672 = vadd.f32 %v658, %v668
          %v673 = vmax.f32 %v671, 0.0
          %v674 = vmax.f32 %v672, 0.0
          %675 = vst [vmem:[%s320] sm:$0xff] %v673
          %676 = vst [vmem:[%s320 + $0x8] sm:$0xff] %v674
        $region60: #{_ffn_apply.1} parent=39 // pred_fallthru
          _
        %p677 = scmp.lt.s32.totalorder %s24, 1
        %s678 = scalar_select %p677, %s24, 1
        %s679 = smul.addr %s678, 2
        %s680 = smul.addr %s679, 8
        %s681 = scalar_lea.vmem %s5, %s680
        // Predicated region
        $region61: #{_ffn_apply.1} parent=39 // pred_check
          %p682 = pneg %p175
        $region62: #{_ffn_apply.1} parent=39 // pred_check_branch
          %684 = sbr.rel (%p682) target = $region64
        $region63: #{_ffn_apply.1} parent=39 // pred_region
          _
        $region64: #{_ffn_apply.1} parent=39 // pred_fallthru
          _
      $region40: #{_ffn_apply.1} parent=5 // pred_fallthru
        _
      %p685 = scmp.le.s32.totalorder 2, %s15
      // Predicated region
      $region65: #{_ffn_apply.1} parent=5 // pred_check
        %p686 = pneg %p685
      $region66: #{_ffn_apply.1} parent=5 // pred_check_branch
        %688 = sbr.rel (%p686) target = $region68
      $region67: #{_ffn_apply.1} parent=5 // pred_region
        %s689 = ssub.s32 %s15, 2
        // Predicated region
        $region69: #{_ffn_apply.1} parent=67 // pred_check
          %p690 = pneg %p181
        $region70: #{_ffn_apply.1} parent=67 // pred_check_branch
          %692 = sbr.rel (%p690) target = $region72
        $region71: #{_ffn_apply.1} parent=67 // pred_region
          %p693 = scmp.lt.s32.totalorder %s26, 1
          %s694 = scalar_select %p693, %s26, 1
          %s695 = smul.addr %s694, 2
          %s696 = smul.addr %s695, 8
          %s697 = scalar_lea.vmem %s5, %s696
        $region72: #{_ffn_apply.1} parent=67 // pred_fallthru
          _
      $region68: #{_ffn_apply.1} parent=5 // pred_fallthru
        _
    $region6: #{_ffn_apply.1} parent=1 // loop_footer
      %s19 = sadd.s32 1, %s15
    $region7: #{_ffn_apply.1} parent=1 // loop_footer_branch
      %14 = sbr.rel target = $region3
    $region8: #{_ffn_apply.1} parent=1 // loop_exit
      _
    %698 = vsyncpa [#allocation4], 1
    %s699 = scalar_lea.sflag [#allocation4], 1
    %700 = vsyncpa %s699, 1
    %701 = vsyncpa [#allocation6], 1

</llo_original>
